<compile_context>
chip_gen: v7x
topology: tpu7x:2x2x1
jax: 0.10.0
libtpu: 0.0.40
codegen_flags: <defaults>
</compile_context>

<pallas_src>
import jax
import jax.numpy as jnp
from jax.experimental import pallas as pl
from jax.experimental.pallas import tpu as pltpu


_LANE = 128
# VMEM budget for the double-buffered f32 input + output activation tiles.
_ACT_VMEM_BUDGET = 16 * 1024 * 1024


def _cdiv(a, b):
    return -(-a // b)


def _round_up(x, m):
    return _cdiv(x, m) * m


def _linear_block_kernel(x_ref, w1_ref, c1_ref, w2_ref, c2_ref, o_ref):
    """out = x + lrelu(W2' @ lrelu(W1' @ x + c1) + c2)  (bias/BN folded into W', c)."""
    x = x_ref[0]                                              # (C, TILE_L) f32
    # conv1 + bn1 (folded): contract over channels, L stays on the lane axis.
    y = jnp.dot(w1_ref[...], x, preferred_element_type=jnp.float32) + c1_ref[...]
    y = jnp.where(y > 0, y, 0.2 * y)                          # LeakyReLU(0.2)
    # dropout: identity in eval mode
    # conv2 + bn2 (folded)
    y = jnp.dot(w2_ref[...], y, preferred_element_type=jnp.float32) + c2_ref[...]
    y = jnp.where(y > 0, y, 0.2 * y)                          # LeakyReLU(0.2)
    o_ref[0] = x + y                                          # residual in f32


def _fold_params(params, eps=1e-5):
    """Fold bias + eval-mode BatchNorm into per-output-row scaled weights and a
    per-channel constant.  Everything stays f32 (mem-bound kernel => f32 MXU
    operands cost nothing and avoid bf16 loss when bn_var is small)."""
    s1 = params["bn1_gamma"] / jnp.sqrt(params["bn1_var"] + eps)
    t1 = params["bn1_beta"] - params["bn1_mean"] * s1
    s2 = params["bn2_gamma"] / jnp.sqrt(params["bn2_var"] + eps)
    t2 = params["bn2_beta"] - params["bn2_mean"] * s2

    w1 = params["w1"] * s1[:, None]               # (C_out, C_in), BN scale folded
    w2 = params["w2"] * s2[:, None]
    c1 = (params["b1"] * s1 + t1)[:, None]        # (C, 1) lane-broadcast constant
    c2 = (params["b2"] * s2 + t2)[:, None]
    return w1, c1, w2, c2


def _pick_l_tiling(n, length, c):
    """Choose (tile_l, num_l_tiles).  tile_l is the full L (small inputs) or a
    multiple of 128 derived from the VMEM activation budget; when the batch axis
    alone would give a 1-step grid, L is split so both v7x TCs get work."""
    cap = _ACT_VMEM_BUDGET // (4 * c * 4)         # 2 bufs * (in + out) * f32 bytes
    cap = max(_LANE, cap // _LANE * _LANE)
    min_tiles = 1 if n >= 2 else 2                # keep the parallel grid >= 2 steps
    num_tiles = max(min_tiles, _cdiv(length, cap))
    if num_tiles <= 1 or length < num_tiles * _LANE:
        return length, 1                          # single full-L block per batch elem
    tile_l = _round_up(_cdiv(length, num_tiles), _LANE)
    return tile_l, _cdiv(length, tile_l)


def linear_block(x_ncl, params):
    """x_ncl: (N, C, L) float32 -> (N, C, L) float32 (eval-mode forward)."""
    n, c, length = x_ncl.shape
    tile_l, n_lt = _pick_l_tiling(n, length, c)
    l_pad = tile_l * n_lt

    # Pad L only if the lane-aligned tiling does not divide it (< one tile of
    # padding); padded columns are computed independently and sliced off below.
    x_in = x_ncl if l_pad == length else jnp.pad(
        x_ncl, ((0, 0), (0, 0), (0, l_pad - length)))

    w1, c1, w2, c2 = _fold_params(params)

    grid = (n, n_lt)
    x_spec = pl.BlockSpec((1, c, tile_l), lambda i, j: (i, 0, j))    # streamed
    w_spec = pl.BlockSpec((c, c), lambda i, j: (0, 0))               # resident
    c_spec = pl.BlockSpec((c, 1), lambda i, j: (0, 0))               # resident

    cost = pl.CostEstimate(
        flops=4 * n * l_pad * c * c,                  # two (C,C) x (C,L) matmuls
        transcendentals=0,
        bytes_accessed=(2 * n * l_pad * c * 4         # x in + out (f32)
                        + 2 * c * c * 4               # two f32 weight matrices
                        + 2 * c * 4),                 # two per-channel constants
    )

    out = pl.pallas_call(
        _linear_block_kernel,
        out_shape=jax.ShapeDtypeStruct((n, c, l_pad), jnp.float32),
        grid=grid,
        in_specs=[x_spec, w_spec, c_spec, w_spec, c_spec],
        out_specs=x_spec,
        compiler_params=pltpu.CompilerParams(
            dimension_semantics=("parallel", "parallel"),   # shard over both TCs
            vmem_limit_bytes=32 * 1024 * 1024),             # fits v7x's 64 MiB VMEM
        cost_estimate=cost,
    )(x_in, w1, c1, w2, c2)

    return out if l_pad == length else out[:, :, :length]


def _make_params(key, c):
    ks = jax.random.split(key, 8)
    # Conv1d(k=1) weights are (C_out, C_in, 1); stored here as (C_out, C_in).
    return {
        "w1": 0.05 * jax.random.normal(ks[0], (c, c), jnp.float32),
        "b1": 0.01 * jax.random.normal(ks[1], (c,), jnp.float32),
        "w2": 0.05 * jax.random.normal(ks[2], (c, c), jnp.float32),
        "b2": 0.01 * jax.random.normal(ks[3], (c,), jnp.float32),
        "bn1_gamma": 1.0 + 0.1 * jax.random.normal(ks[4], (c,), jnp.float32),
        "bn1_beta": 0.1 * jax.random.normal(ks[5], (c,), jnp.float32),
        "bn1_mean": jnp.zeros((c,), jnp.float32),
        "bn1_var": jnp.ones((c,), jnp.float32),
        "bn2_gamma": 1.0 + 0.1 * jax.random.normal(ks[6], (c,), jnp.float32),
        "bn2_beta": 0.1 * jax.random.normal(ks[7], (c,), jnp.float32),
        "bn2_mean": jnp.zeros((c,), jnp.float32),
        "bn2_var": jnp.ones((c,), jnp.float32),
    }


def _reference(x_ncl, params):
    """Pure-JAX f32 reference of the eval-mode forward."""
    eps = 1e-5
    n, c, length = x_ncl.shape
    x = jnp.transpose(x_ncl, (0, 2, 1)).reshape(n * length, c)

    def bn(y, g, b, m, v):
        return g / jnp.sqrt(v + eps) * (y - m) + b

    y = x @ params["w1"].T + params["b1"]
    y = bn(y, params["bn1_gamma"], params["bn1_beta"], params["bn1_mean"], params["bn1_var"])
    y = jnp.where(y > 0, y, 0.2 * y)
    y = y @ params["w2"].T + params["b2"]
    y = bn(y, params["bn2_gamma"], params["bn2_beta"], params["bn2_mean"], params["bn2_var"])
    y = jnp.where(y > 0, y, 0.2 * y)
    out = x + y
    return jnp.transpose(out.reshape(n, length, c), (0, 2, 1))


if __name__ == "__main__":
    key = jax.random.PRNGKey(0)
    k_x, k_p = jax.random.split(key)

    linear_size = 32    # C (channels)
    batch, length = 2, 256
    x = jax.random.normal(k_x, (batch, linear_size, length), jnp.float32)
    params = _make_params(k_p, linear_size)

    out = linear_block(x, params)
    out = jax.block_until_ready(out)

    ref = _reference(x, params)
    assert out.shape == (batch, linear_size, length)
    # f32 weights / f32 residual; tolerance covers MXU operand rounding.
    assert jnp.allclose(out, ref, atol=1e-2, rtol=1e-2), float(jnp.max(jnp.abs(out - ref)))

    print("KERNEL_OK")
</pallas_src>

<mosaic_0001>
module attributes {stable_mosaic.version = 11 : i64} {
  func.func @_linear_block_kernel(%arg0: i32, %arg1: i32, %arg2: memref<1x32x256xf32, #tpu.memory_space<vmem>>, %arg3: memref<32x32xf32, #tpu.memory_space<vmem>>, %arg4: memref<32x1xf32, #tpu.memory_space<vmem>>, %arg5: memref<32x32xf32, #tpu.memory_space<vmem>>, %arg6: memref<32x1xf32, #tpu.memory_space<vmem>>, %arg7: memref<1x32x256xf32, #tpu.memory_space<vmem>>) attributes {dimension_semantics = [#tpu.dimension_semantics<parallel>, #tpu.dimension_semantics<parallel>], iteration_bounds = array<i64: 2, 1>, scalar_prefetch = 0 : i64, scratch_operands = 0 : i64, tpu.core_type = #tpu.core_type<tc>, window_params = [{transform_indices = @transform_0, window_bounds = array<i64: 1, 32, 256>}, {pipeline_mode = #tpu.pipeline_mode<synchronous>, transform_indices = @transform_1, window_bounds = array<i64: 32, 32>}, {pipeline_mode = #tpu.pipeline_mode<synchronous>, transform_indices = @transform_2, window_bounds = array<i64: 32, 1>}, {pipeline_mode = #tpu.pipeline_mode<synchronous>, transform_indices = @transform_3, window_bounds = array<i64: 32, 32>}, {pipeline_mode = #tpu.pipeline_mode<synchronous>, transform_indices = @transform_4, window_bounds = array<i64: 32, 1>}, {transform_indices = @transform_5, window_bounds = array<i64: 1, 32, 256>}]} {
    %c0 = arith.constant 0 : index
    %c0_0 = arith.constant 0 : index
    %c0_1 = arith.constant 0 : index
    %0 = vector.load %arg2[%c0, %c0_0, %c0_1] : memref<1x32x256xf32, #tpu.memory_space<vmem>>, vector<1x32x256xf32>
    %1 = vector.shape_cast %0 : vector<1x32x256xf32> to vector<32x256xf32>
    %c0_2 = arith.constant 0 : index
    %c0_3 = arith.constant 0 : index
    %2 = vector.load %arg3[%c0_2, %c0_3] : memref<32x32xf32, #tpu.memory_space<vmem>>, vector<32x32xf32>
    %cst = arith.constant dense<0.000000e+00> : vector<32x256xf32>
    %3 = tpu.matmul %2, %1, %cst {dimension_numbers = #tpu.dot_dimension_numbers<[1], [0], [0], [1], [0, 0, 1, 1], [], []>} : vector<32x32xf32>, vector<32x256xf32>, vector<32x256xf32> -> vector<32x256xf32>
    %c0_4 = arith.constant 0 : index
    %c0_5 = arith.constant 0 : index
    %4 = vector.load %arg4[%c0_4, %c0_5] : memref<32x1xf32, #tpu.memory_space<vmem>>, vector<32x1xf32>
    %5 = vector.broadcast %4 : vector<32x1xf32> to vector<32x256xf32>
    %6 = arith.addf %3, %5 : vector<32x256xf32>
    %cst_6 = arith.constant 0.000000e+00 : f32
    %7 = vector.broadcast %cst_6 : f32 to vector<32x256xf32>
    %8 = arith.cmpf ogt, %6, %7 : vector<32x256xf32>
    %cst_7 = arith.constant 2.000000e-01 : f32
    %9 = vector.broadcast %cst_7 : f32 to vector<32x256xf32>
    %10 = arith.mulf %9, %6 : vector<32x256xf32>
    %11 = arith.select %8, %6, %10 : vector<32x256xi1>, vector<32x256xf32>
    %c0_8 = arith.constant 0 : index
    %c0_9 = arith.constant 0 : index
    %12 = vector.load %arg5[%c0_8, %c0_9] : memref<32x32xf32, #tpu.memory_space<vmem>>, vector<32x32xf32>
    %cst_10 = arith.constant dense<0.000000e+00> : vector<32x256xf32>
    %13 = tpu.matmul %12, %11, %cst_10 {dimension_numbers = #tpu.dot_dimension_numbers<[1], [0], [0], [1], [0, 0, 1, 1], [], []>} : vector<32x32xf32>, vector<32x256xf32>, vector<32x256xf32> -> vector<32x256xf32>
    %c0_11 = arith.constant 0 : index
    %c0_12 = arith.constant 0 : index
    %14 = vector.load %arg6[%c0_11, %c0_12] : memref<32x1xf32, #tpu.memory_space<vmem>>, vector<32x1xf32>
    %15 = vector.broadcast %14 : vector<32x1xf32> to vector<32x256xf32>
    %16 = arith.addf %13, %15 : vector<32x256xf32>
    %cst_13 = arith.constant 0.000000e+00 : f32
    %17 = vector.broadcast %cst_13 : f32 to vector<32x256xf32>
    %18 = arith.cmpf ogt, %16, %17 : vector<32x256xf32>
    %cst_14 = arith.constant 2.000000e-01 : f32
    %19 = vector.broadcast %cst_14 : f32 to vector<32x256xf32>
    %20 = arith.mulf %19, %16 : vector<32x256xf32>
    %21 = arith.select %18, %16, %20 : vector<32x256xi1>, vector<32x256xf32>
    %22 = arith.addf %1, %21 : vector<32x256xf32>
    %c0_15 = arith.constant 0 : index
    %c0_16 = arith.constant 0 : index
    %c0_17 = arith.constant 0 : index
    %23 = vector.load %arg7[%c0_15, %c0_16, %c0_17] : memref<1x32x256xf32, #tpu.memory_space<vmem>>, vector<1x32x256xf32>
    %24 = vector.shape_cast %23 : vector<1x32x256xf32> to vector<32x256xf32>
    %25 = vector.shape_cast %22 : vector<32x256xf32> to vector<1x32x256xf32>
    tpu.vector_store %arg7[%c0_15, %c0_16, %c0_17], %25 {strides = array<i32>} : memref<1x32x256xf32, #tpu.memory_space<vmem>>, vector<1x32x256xf32>,
    return
  }
  func.func @transform_0(%arg0: i32, %arg1: i32) -> (i32, i32, i32) {
    %c0_i32 = arith.constant 0 : i32
    %c0_i32_0 = arith.constant 0 : i32
    return %arg0, %c0_i32, %arg1 : i32, i32, i32
  }
  func.func @transform_1(%arg0: i32, %arg1: i32) -> (i32, i32) {
    %c0_i32 = arith.constant 0 : i32
    %c0_i32_0 = arith.constant 0 : i32
    %c0_i32_1 = arith.constant 0 : i32
    return %c0_i32, %c0_i32_0 : i32, i32
  }
  func.func @transform_2(%arg0: i32, %arg1: i32) -> (i32, i32) {
    %c0_i32 = arith.constant 0 : i32
    %c0_i32_0 = arith.constant 0 : i32
    %c0_i32_1 = arith.constant 0 : i32
    return %c0_i32, %c0_i32_0 : i32, i32
  }
  func.func @transform_3(%arg0: i32, %arg1: i32) -> (i32, i32) {
    %c0_i32 = arith.constant 0 : i32
    %c0_i32_0 = arith.constant 0 : i32
    %c0_i32_1 = arith.constant 0 : i32
    return %c0_i32, %c0_i32_0 : i32, i32
  }
  func.func @transform_4(%arg0: i32, %arg1: i32) -> (i32, i32) {
    %c0_i32 = arith.constant 0 : i32
    %c0_i32_0 = arith.constant 0 : i32
    %c0_i32_1 = arith.constant 0 : i32
    return %c0_i32, %c0_i32_0 : i32, i32
  }
  func.func @transform_5(%arg0: i32, %arg1: i32) -> (i32, i32, i32) {
    %c0_i32 = arith.constant 0 : i32
    %c0_i32_0 = arith.constant 0 : i32
    return %arg0, %c0_i32, %arg1 : i32, i32, i32
  }
}

</mosaic_0001>

<llo_original>
// kernel: tpu_custom_call.1
$region0: #{tpu_custom_call.1}
  #allocation0 [shape = 'u32[]', space=smem, size = 0x4, offset = 0x4, fixed_abs, tag = 'smem constant byte address 0x4 - core index']
  #allocation1 [shape = 'u32[144,128]{1,0:T(1,128)}', space=vmem, size = 0x12000, scoped, tag = 'internal scratch']
  %s0 = inlined_call_operand.hbm [shape: f32[2,32,256], index: 0, kind: input, shape index: {}]
  %s1 = inlined_call_operand.vmem [shape: f32[32,32], index: 1, kind: input, shape index: {}]
  %s2 = inlined_call_operand.vmem [shape: f32[32,1], index: 2, kind: input, shape index: {}]
  %s3 = inlined_call_operand.vmem [shape: f32[32,32], index: 3, kind: input, shape index: {}]
  %s4 = inlined_call_operand.vmem [shape: f32[32,1], index: 4, kind: input, shape index: {}]
  %s5 = inlined_call_operand.hbm [shape: f32[2,32,256], index: 5, kind: output, shape index: {}]
  %s6 = sld [smem:[#allocation0]]
  $region57: #{tpu_custom_call.1} parent=0
    _
  %s8 = ssub.s32 1, %s6
  %s9 = scalar_select 0, %s8, %s6
  $region1: #{tpu_custom_call.1} parent=0
    #allocation2 [shape = 'u8[65536]{0}', space=vmem, size = 0x10000, scoped, tag = 'input window, operand 0']
    #allocation3 [shape = 's32[2]{0}', space=sflag, size = 0x8, scoped, tag = 'scoped memory for tpu_custom_call.1']
    #allocation4 [shape = 's32[2]{0}', space=sflag, size = 0x8, scoped, tag = 'scoped memory for tpu_custom_call.1']
    #allocation5 [shape = 'u8[65536]{0}', space=vmem, size = 0x10000, scoped, tag = 'output window, operand 0']
    %10 = vsyncpa [#allocation3], 0
    %s11 = scalar_lea.sflag [#allocation3], 1
    %12 = vsyncpa %s11, 0
    %13 = vsyncpa [#allocation4], 0
    %s14 = scalar_lea.sflag [#allocation4], 1
    %15 = vsyncpa %s14, 0
    loop: start=0, step=1, limit=4
    $region2: #{tpu_custom_call.1} parent=1 // loop_pre_header
      _
    $region3: #{tpu_custom_call.1} parent=1 // loop_header
      %s17 = sphi 0, %s21
      %p18 = scmp.ge.s32.totalorder %s17, 4
      %s24 = sphi 0, %s36
      %s25 = sphi 0, %s32
      %s26 = sphi 0, %s24
      %s27 = sphi 0, %s25
      %s28 = sphi 0, %s26
      %s29 = sphi 0, %s27
      %s41 = sphi 0, %s43
      %s44 = sphi 0, %s41
      %s45 = sphi 0, %s44
      %s61 = sphi 0, %s45
      %s65 = sphi 0, %s65
      %s67 = sphi 0, %s65
      %s68 = sphi 0, %s67
      %s82 = sphi 0, %s68
      %s86 = sphi 0, %s86
      %s88 = sphi 0, %s86
      %s89 = sphi 0, %s88
      %s103 = sphi 0, %s89
      %s107 = sphi 0, %s107
      %s109 = sphi 0, %s107
      %s110 = sphi 0, %s109
      %s124 = sphi 0, %s110
      %s128 = sphi 0, %s128
      %s130 = sphi 0, %s128
      %s131 = sphi 0, %s130
      %s145 = sphi 0, %s131
      %s153 = sphi 0, %s155
      %s156 = sphi 0, %s153
      %s157 = sphi 0, %s156
      %s173 = sphi 0, %s157
    $region4: #{tpu_custom_call.1} parent=1 // loop_header_branch
      %20 = sbr.rel (%p18) target = $region8
    $region5: #{tpu_custom_call.1} parent=1 // loop_body
      %s22 = ssub.s32 %s17, 1
      %s23 = ssub.s32 %s17, 2
      %s30 = sadd.s32 1, %s25
      %p31 = scmp.ge.s32.totalorder %s30, 1
      %s32 = scalar_select %p31, 0, %s30
      %s33 = sadd.s32 1, %s24
      %s34 = scalar_select %p31, %s33, %s24
      %p35 = scmp.ge.s32.totalorder %s34, 2
      %s36 = scalar_select %p35, 0, %s34
      %s37 = ssub.s32 %s24, %s36
      %s38 = ssub.s32 %s25, %s32
      %s39 = sor.u32 %s37, %s38
      %p40 = scmp.eq.s32.totalorder %s39, 0
      %s42 = sadd.s32 %s41, 1
      %s43 = scalar_select %p40, %s41, %s42
      %p46 = pneg %p40
      %p47 = scmp.eq.s32.totalorder %s17, 1
      %p48 = por %p46, %p47
      %p49 = scmp.ne.s32.totalorder %s41, %s44
      %p50 = scmp.eq.s32.totalorder %s17, 0
      %p51 = por %p49, %p50
      %p52 = scmp.ne.s32.totalorder %s41, %s44
      %p53 = scmp.eq.s32.totalorder %s22, 1
      %p54 = por %p52, %p53
      %p55 = scmp.ne.s32.totalorder %s44, %s45
      %p56 = scmp.eq.s32.totalorder %s22, 0
      %p57 = por %p55, %p56
      %p58 = scmp.ne.s32.totalorder %s44, %s45
      %p59 = scmp.eq.s32.totalorder %s23, 1
      %p60 = por %p58, %p59
      %p62 = scmp.ne.s32.totalorder %s45, %s61
      %p63 = scmp.eq.s32.totalorder %s23, 0
      %p64 = por %p62, %p63
      %s66 = sadd.s32 %s65, 1
      %p69 = scmp.eq.s32.totalorder %s17, 1
      %p70 = scmp.ne.s32.totalorder %s65, %s67
      %p71 = scmp.eq.s32.totalorder %s17, 0
      %p72 = por %p70, %p71
      %p73 = scmp.ne.s32.totalorder %s65, %s67
      %p74 = scmp.eq.s32.totalorder %s22, 1
      %p75 = por %p73, %p74
      %p76 = scmp.ne.s32.totalorder %s67, %s68
      %p77 = scmp.eq.s32.totalorder %s22, 0
      %p78 = por %p76, %p77
      %p79 = scmp.ne.s32.totalorder %s67, %s68
      %p80 = scmp.eq.s32.totalorder %s23, 1
      %p81 = por %p79, %p80
      %p83 = scmp.ne.s32.totalorder %s68, %s82
      %p84 = scmp.eq.s32.totalorder %s23, 0
      %p85 = por %p83, %p84
      %s87 = sadd.s32 %s86, 1
      %p90 = scmp.eq.s32.totalorder %s17, 1
      %p91 = scmp.ne.s32.totalorder %s86, %s88
      %p92 = scmp.eq.s32.totalorder %s17, 0
      %p93 = por %p91, %p92
      %p94 = scmp.ne.s32.totalorder %s86, %s88
      %p95 = scmp.eq.s32.totalorder %s22, 1
      %p96 = por %p94, %p95
      %p97 = scmp.ne.s32.totalorder %s88, %s89
      %p98 = scmp.eq.s32.totalorder %s22, 0
      %p99 = por %p97, %p98
      %p100 = scmp.ne.s32.totalorder %s88, %s89
      %p101 = scmp.eq.s32.totalorder %s23, 1
      %p102 = por %p100, %p101
      %p104 = scmp.ne.s32.totalorder %s89, %s103
      %p105 = scmp.eq.s32.totalorder %s23, 0
      %p106 = por %p104, %p105
      %s108 = sadd.s32 %s107, 1
      %p111 = scmp.eq.s32.totalorder %s17, 1
      %p112 = scmp.ne.s32.totalorder %s107, %s109
      %p113 = scmp.eq.s32.totalorder %s17, 0
      %p114 = por %p112, %p113
      %p115 = scmp.ne.s32.totalorder %s107, %s109
      %p116 = scmp.eq.s32.totalorder %s22, 1
      %p117 = por %p115, %p116
      %p118 = scmp.ne.s32.totalorder %s109, %s110
      %p119 = scmp.eq.s32.totalorder %s22, 0
      %p120 = por %p118, %p119
      %p121 = scmp.ne.s32.totalorder %s109, %s110
      %p122 = scmp.eq.s32.totalorder %s23, 1
      %p123 = por %p121, %p122
      %p125 = scmp.ne.s32.totalorder %s110, %s124
      %p126 = scmp.eq.s32.totalorder %s23, 0
      %p127 = por %p125, %p126
      %s129 = sadd.s32 %s128, 1
      %p132 = scmp.eq.s32.totalorder %s17, 1
      %p133 = scmp.ne.s32.totalorder %s128, %s130
      %p134 = scmp.eq.s32.totalorder %s17, 0
      %p135 = por %p133, %p134
      %p136 = scmp.ne.s32.totalorder %s128, %s130
      %p137 = scmp.eq.s32.totalorder %s22, 1
      %p138 = por %p136, %p137
      %p139 = scmp.ne.s32.totalorder %s130, %s131
      %p140 = scmp.eq.s32.totalorder %s22, 0
      %p141 = por %p139, %p140
      %p142 = scmp.ne.s32.totalorder %s130, %s131
      %p143 = scmp.eq.s32.totalorder %s23, 1
      %p144 = por %p142, %p143
      %p146 = scmp.ne.s32.totalorder %s131, %s145
      %p147 = scmp.eq.s32.totalorder %s23, 0
      %p148 = por %p146, %p147
      %s149 = ssub.s32 %s24, %s36
      %s150 = ssub.s32 %s25, %s32
      %s151 = sor.u32 %s149, %s150
      %p152 = scmp.eq.s32.totalorder %s151, 0
      %s154 = sadd.s32 %s153, 1
      %s155 = scalar_select %p152, %s153, %s154
      %p158 = pneg %p152
      %p159 = scmp.eq.s32.totalorder %s17, 1
      %p160 = por %p158, %p159
      %p161 = scmp.ne.s32.totalorder %s153, %s156
      %p162 = scmp.eq.s32.totalorder %s17, 0
      %p163 = por %p161, %p162
      %p164 = scmp.ne.s32.totalorder %s153, %s156
      %p165 = scmp.eq.s32.totalorder %s22, 1
      %p166 = por %p164, %p165
      %p167 = scmp.ne.s32.totalorder %s156, %s157
      %p168 = scmp.eq.s32.totalorder %s22, 0
      %p169 = por %p167, %p168
      %p170 = scmp.ne.s32.totalorder %s156, %s157
      %p171 = scmp.eq.s32.totalorder %s23, 1
      %p172 = por %p170, %p171
      %p174 = scmp.ne.s32.totalorder %s157, %s173
      %p175 = scmp.eq.s32.totalorder %s23, 0
      %p176 = por %p174, %p175
      %p177 = scmp.le.s32.totalorder 1, %s17
      %p178 = scmp.lt.s32.totalorder %s17, 3
      %p179 = pnand %p177, %p178
      %p180 = pneg %p179
      // Predicated region
      $region9: #{tpu_custom_call.1} parent=5 // pred_check
        _
      $region10: #{tpu_custom_call.1} parent=5 // pred_check_branch
        %182 = sbr.rel (%p179) target = $region12
      $region11: #{tpu_custom_call.1} parent=5 // pred_region
        %s183 = ssub.s32 %s17, 1
        // Predicated region
        $region13: #{tpu_custom_call.1} parent=11 // pred_check
          %p184 = pneg %p78
        $region14: #{tpu_custom_call.1} parent=11 // pred_check_branch
          %186 = sbr.rel (%p184) target = $region16
        $region15: #{tpu_custom_call.1} parent=11 // pred_region
          _
        $region16: #{tpu_custom_call.1} parent=11 // pred_fallthru
          _
        // Predicated region
        $region17: #{tpu_custom_call.1} parent=11 // pred_check
          %p187 = pneg %p99
        $region18: #{tpu_custom_call.1} parent=11 // pred_check_branch
          %189 = sbr.rel (%p187) target = $region20
        $region19: #{tpu_custom_call.1} parent=11 // pred_region
          _
        $region20: #{tpu_custom_call.1} parent=11 // pred_fallthru
          _
        // Predicated region
        $region21: #{tpu_custom_call.1} parent=11 // pred_check
          %p190 = pneg %p120
        $region22: #{tpu_custom_call.1} parent=11 // pred_check_branch
          %192 = sbr.rel (%p190) target = $region24
        $region23: #{tpu_custom_call.1} parent=11 // pred_region
          _
        $region24: #{tpu_custom_call.1} parent=11 // pred_fallthru
          _
        // Predicated region
        $region25: #{tpu_custom_call.1} parent=11 // pred_check
          %p193 = pneg %p141
        $region26: #{tpu_custom_call.1} parent=11 // pred_check_branch
          %195 = sbr.rel (%p193) target = $region28
        $region27: #{tpu_custom_call.1} parent=11 // pred_region
          _
        $region28: #{tpu_custom_call.1} parent=11 // pred_fallthru
          _
      $region12: #{tpu_custom_call.1} parent=5 // pred_fallthru
        _
      %p196 = scmp.lt.s32.totalorder %s17, 2
      // Predicated region
      $region29: #{tpu_custom_call.1} parent=5 // pred_check
        %p197 = pneg %p196
      $region30: #{tpu_custom_call.1} parent=5 // pred_check_branch
        %199 = sbr.rel (%p197) target = $region32
      $region31: #{tpu_custom_call.1} parent=5 // pred_region
        // Predicated region
        $region33: #{tpu_custom_call.1} parent=31 // pred_check
          %p200 = pneg %p51
        $region34: #{tpu_custom_call.1} parent=31 // pred_check_branch
          %202 = sbr.rel (%p200) target = $region36
        $region35: #{tpu_custom_call.1} parent=31 // pred_region
          %s203 = sand.u32 %s41, 1
          %s204 = scalar_lea.sflag [#allocation3], %s203
          %s205 = sand.u32 %s41, 1
          %s206 = smul.addr %s205, 64
          %s207 = scalar_lea.vmem [#allocation2], %s206
          %s208 = smul.u32 2, %s25
          %s210 = ssub.s32 1024, 1024
          %211 = vsyncadd %s204, %s210
          %s212 = smul.addr %s24, 8
          %s213 = sadd.s32 %s208, %s212
          %s214 = smul.addr %s213, 128
          %s215 = scalar_lea.hbm %s0, %s214
          %s216 = sshll.u32 %s207, 4
          %s217 = int_to_ptr.vmem [resolvable:$true] %s216
          %222 = dma.hbm_to_vmem [thread:$0]  %s215, 1024, %s217, %s204, 256, 256, 16
        $region36: #{tpu_custom_call.1} parent=31 // pred_fallthru
          _
      $region32: #{tpu_custom_call.1} parent=5 // pred_fallthru
        _
      %p223 = scmp.le.s32.totalorder 1, %s17
      %p224 = scmp.lt.s32.totalorder %s17, 3
      %p225 = pnand %p223, %p224
      %p226 = pneg %p225
      // Predicated region
      $region37: #{tpu_custom_call.1} parent=5 // pred_check
        _
      $region38: #{tpu_custom_call.1} parent=5 // pred_check_branch
        %228 = sbr.rel (%p225) target = $region40
      $region39: #{tpu_custom_call.1} parent=5 // pred_region
        %s229 = ssub.s32 %s17, 1
        %s230 = sand.u32 %s44, 1
        %s231 = scalar_lea.sflag [#allocation3], %s230
        %s232 = sand.u32 %s44, 1
        %s233 = smul.addr %s232, 64
        %s234 = scalar_lea.vmem [#allocation2], %s233
        // Predicated region
        $region41: #{tpu_custom_call.1} parent=39 // pred_check
          %p235 = pneg %p57
        $region42: #{tpu_custom_call.1} parent=39 // pred_check_branch
          %237 = sbr.rel (%p235) target = $region44
        $region43: #{tpu_custom_call.1} parent=39 // pred_region
          %238 = dma.done %s231, 1024
        $region44: #{tpu_custom_call.1} parent=39 // pred_fallthru
          _
        %s239 = sand.u32 %s44, 1
        %s240 = scalar_lea.sflag [#allocation3], %s239
        %s241 = sand.u32 %s44, 1
        %s242 = smul.addr %s241, 64
        %s243 = scalar_lea.vmem [#allocation2], %s242
        %p244 = pneg %p57
        %p245 = pneg %p54
        %p246 = pneg %p78
        %p247 = pneg %p75
        %p248 = pneg %p99
        %p249 = pneg %p96
        %p250 = pneg %p120
        %p251 = pneg %p117
        %p252 = pneg %p141
        %p253 = pneg %p138
        %p254 = pneg %p169
        %p255 = pneg %p166
        %s256 = sand.u32 %s156, 1
        %s257 = scalar_lea.sflag [#allocation4], %s256
        %s258 = sand.u32 %s156, 1
        %s259 = smul.addr %s258, 64
        %s260 = scalar_lea.vmem [#allocation5], %s259
        %s261 = smul.u32 2, %s27
        %s262 = smul.u32 2, %s27
        %v263 = vld [vmem:[%s234] sm:$0xff]
        %v264 = vld [vmem:[%s234 + $0x8] sm:$0xff]
        %v265 = vld [vmem:[%s234 + $0x10] sm:$0xff]
        %v266 = vld [vmem:[%s234 + $0x18] sm:$0xff]
        %v267 = vld [vmem:[%s234 + $0x20] sm:$0xff]
        %v268 = vld [vmem:[%s234 + $0x28] sm:$0xff]
        %v269 = vld [vmem:[%s234 + $0x30] sm:$0xff]
        %v270 = vld [vmem:[%s234 + $0x38] sm:$0xff]
        %v271 = vld [vmem:[%s1] sm:$0xff]
        %v272 = vld [vmem:[%s1 + $0x8] sm:$0xff]
        %v273 = vld [vmem:[%s1 + $0x10] sm:$0xff]
        %v274 = vld [vmem:[%s1 + $0x18] sm:$0xff]
        %v275 = vld [vmem:[%s2] sm:$0xff]
        %v276 = vld [vmem:[%s2 + $0x8] sm:$0xff]
        %v277 = vld [vmem:[%s2 + $0x10] sm:$0xff]
        %v278 = vld [vmem:[%s2 + $0x18] sm:$0xff]
        %280 = vset.pattern.permute.xlu0 0
        %281 = vperm.xlu0 %280, %v275
        %v282 = vpop.permute.xlu0 %281
        %285 = vset.pattern.permute.xlu0 0
        %286 = vperm.xlu0 %285, %v276
        %v287 = vpop.permute.xlu0 %286
        %290 = vset.pattern.permute.xlu0 0
        %291 = vperm.xlu0 %290, %v277
        %v292 = vpop.permute.xlu0 %291
        %295 = vset.pattern.permute.xlu0 0
        %296 = vperm.xlu0 %295, %v278
        %v297 = vpop.permute.xlu0 %296
        %vm299 = vcmask 261120
        %v301 = vsel %vm299, %v271, 0
        %v304 = vsel %vm299, %v272, 0
        %v307 = vsel %vm299, %v273, 0
        %v310 = vsel %vm299, %v274, 0
        %312 = vmatprep.subr.mxu0 %v264
        %313 = vmatpush1.msra.mxu0 %v263
        %314 = vmatprep.subr.mxu0 %v266
        %315 = vmatpush1.msra.mxu0 %v265
        %316 = vmatprep.subr.mxu0 %v268
        %317 = vmatpush1.msra.mxu0 %v267
        %318 = vmatprep.subr.mxu0 %v270
        %319 = vmatpush1.msra.mxu0 %v269
        %320 = vmatprep.subr.mxu0 0.0
        %321 = vmatpush1.msra.mxu0 0.0
        %322 = vmatprep.subr.mxu0 0.0
        %323 = vmatpush1.msra.mxu0 0.0
        %324 = vmatprep.subr.mxu0 0.0
        %325 = vmatpush1.msra.mxu0 0.0
        %326 = vmatprep.subr.mxu0 0.0
        %327 = vmatpush1.msra.mxu0 0.0
        %328 = vmatprep.subr.mxu0 0.0
        %329 = vmatpush1.msra.mxu0 0.0
        %330 = vmatprep.subr.mxu0 0.0
        %331 = vmatpush1.msra.mxu0 0.0
        %332 = vmatprep.subr.mxu0 0.0
        %333 = vmatpush1.msra.mxu0 0.0
        %334 = vmatprep.subr.mxu0 0.0
        %335 = vmatpush1.msra.mxu0 0.0
        %336 = vmatprep.subr.mxu0 0.0
        %337 = vmatpush1.msra.mxu0 0.0
        %338 = vmatprep.subr.mxu0 0.0
        %339 = vmatpush1.msra.mxu0 0.0
        %340 = vmatprep.subr.mxu0 0.0
        %341 = vmatpush1.msra.mxu0 0.0
        %342 = vmatprep.subr.mxu0 0.0
        %343 = vmatpush1.msra.mxu0 0.0
        %344 = vmatprep.subr.mxu0 0.0
        %345 = vmatpush1.msra.mxu0 0.0
        %346 = vmatprep.subr.mxu0 0.0
        %347 = vmatpush1.msra.mxu0 0.0
        %348 = vmatprep.subr.mxu0 0.0
        %349 = vmatpush1.msra.mxu0 0.0
        %350 = vmatprep.subr.mxu0 0.0
        %351 = vmatpush1.msra.mxu0 0.0
        %352 = vmatprep.subr.mxu0 0.0
        %353 = vmatpush1.msra.mxu0 0.0
        %354 = vmatprep.subr.mxu0 0.0
        %355 = vmatpush1.msra.mxu0 0.0
        %356 = vmatprep.subr.mxu0 0.0
        %357 = vmatpush1.msra.mxu0 0.0
        %358 = vmatprep.subr.mxu0 0.0
        %359 = vmatpush1.msra.mxu0 0.0
        %360 = vmatprep.subr.mxu0 0.0
        %361 = vmatpush1.msra.mxu0 0.0
        %362 = vmatprep.subr.mxu0 0.0
        %363 = vmatpush1.msra.mxu0 0.0
        %364 = vmatprep.subr.mxu0 0.0
        %365 = vmatpush1.msra.mxu0 0.0
        %366 = vmatprep.subr.mxu0 0.0
        %367 = vmatpush1.msra.mxu0 0.0
        %368 = vmatprep.subr.mxu0 0.0
        %369 = vmatpush1.msra.mxu0 0.0
        %370 = vmatprep.subr.mxu0 0.0
        %371 = vmatpush1.msra.mxu0 0.0
        %372 = vmatprep.subr.mxu0 0.0
        %373 = vmatpush1.msra.mxu0 0.0
        %374 = vmatprep.subr.mxu0 0.0
        %375 = vmatpush1.msra.mxu0 0.0
        %376 = vmatprep.mubr.f32.mxu0 0.0
        %377 = vmatmul.mubr.f32.gmra.mrb[0].mxu0 %v301
        %v378 = vpop.f32.mrb[0].mxu0
        %v379 = vadd.f32 %v282, %v378
        %v380 = vpop.f32.mrb[0].mxu0
        %v381 = vadd.f32 %v282, %v380
        %382 = vmatprep.mubr.f32.mxu0 0.0
        %383 = vmatmul.mubr.f32.gmra.mrb[0].mxu0 %v304
        %v384 = vpop.f32.mrb[0].mxu0
        %v385 = vadd.f32 %v287, %v384
        %v386 = vpop.f32.mrb[0].mxu0
        %v387 = vadd.f32 %v287, %v386
        %388 = vmatprep.mubr.f32.mxu0 0.0
        %389 = vmatmul.mubr.f32.gmra.mrb[0].mxu0 %v307
        %v390 = vpop.f32.mrb[0].mxu0
        %v391 = vadd.f32 %v292, %v390
        %v392 = vpop.f32.mrb[0].mxu0
        %v393 = vadd.f32 %v292, %v392
        %394 = vmatprep.mubr.f32.mxu0 0.0
        %395 = vmatmul.mubr.f32.gmra.mrb[0].mxu0 %v310
        %v396 = vpop.f32.mrb[0].mxu0
        %v397 = vadd.f32 %v297, %v396
        %v398 = vpop.f32.mrb[0].mxu0
        %v399 = vadd.f32 %v297, %v398
        %400 = vdwg.mxu0
        %vm401 = vcmp.gt.f32.partialorder %v379, 0.0
        %vm402 = vcmp.gt.f32.partialorder %v381, 0.0
        %vm403 = vcmp.gt.f32.partialorder %v385, 0.0
        %vm404 = vcmp.gt.f32.partialorder %v387, 0.0
        %vm405 = vcmp.gt.f32.partialorder %v391, 0.0
        %vm406 = vcmp.gt.f32.partialorder %v393, 0.0
        %vm407 = vcmp.gt.f32.partialorder %v397, 0.0
        %vm408 = vcmp.gt.f32.partialorder %v399, 0.0
        %v409 = vmul.f32 %v379, 0.2
        %v410 = vmul.f32 %v381, 0.2
        %v411 = vmul.f32 %v385, 0.2
        %v412 = vmul.f32 %v387, 0.2
        %v413 = vmul.f32 %v391, 0.2
        %v414 = vmul.f32 %v393, 0.2
        %v415 = vmul.f32 %v397, 0.2
        %v416 = vmul.f32 %v399, 0.2
        %v417 = vsel %vm401, %v379, %v409
        %v418 = vsel %vm402, %v381, %v410
        %v419 = vsel %vm403, %v385, %v411
        %v420 = vsel %vm404, %v387, %v412
        %v421 = vsel %vm405, %v391, %v413
        %v422 = vsel %vm406, %v393, %v414
        %v423 = vsel %vm407, %v397, %v415
        %v424 = vsel %vm408, %v399, %v416
        %v425 = vld [vmem:[%s3] sm:$0xff]
        %v426 = vld [vmem:[%s3 + $0x8] sm:$0xff]
        %v427 = vld [vmem:[%s3 + $0x10] sm:$0xff]
        %v428 = vld [vmem:[%s3 + $0x18] sm:$0xff]
        %v429 = vld [vmem:[%s4] sm:$0xff]
        %v430 = vld [vmem:[%s4 + $0x8] sm:$0xff]
        %v431 = vld [vmem:[%s4 + $0x10] sm:$0xff]
        %v432 = vld [vmem:[%s4 + $0x18] sm:$0xff]
        %434 = vset.pattern.permute.xlu0 0
        %435 = vperm.xlu0 %434, %v429
        %v436 = vpop.permute.xlu0 %435
        %439 = vset.pattern.permute.xlu0 0
        %440 = vperm.xlu0 %439, %v430
        %v441 = vpop.permute.xlu0 %440
        %444 = vset.pattern.permute.xlu0 0
        %445 = vperm.xlu0 %444, %v431
        %v446 = vpop.permute.xlu0 %445
        %449 = vset.pattern.permute.xlu0 0
        %450 = vperm.xlu0 %449, %v432
        %v451 = vpop.permute.xlu0 %450
        %v454 = vsel %vm299, %v425, 0
        %v457 = vsel %vm299, %v426, 0
        %v460 = vsel %vm299, %v427, 0
        %v463 = vsel %vm299, %v428, 0
        %465 = vmatprep.subr.mxu0 %v418
        %466 = vmatpush1.msra.mxu0 %v417
        %467 = vmatprep.subr.mxu0 %v420
        %468 = vmatpush1.msra.mxu0 %v419
        %469 = vmatprep.subr.mxu0 %v422
        %470 = vmatpush1.msra.mxu0 %v421
        %471 = vmatprep.subr.mxu0 %v424
        %472 = vmatpush1.msra.mxu0 %v423
        %473 = vmatprep.subr.mxu0 0.0
        %474 = vmatpush1.msra.mxu0 0.0
        %475 = vmatprep.subr.mxu0 0.0
        %476 = vmatpush1.msra.mxu0 0.0
        %477 = vmatprep.subr.mxu0 0.0
        %478 = vmatpush1.msra.mxu0 0.0
        %479 = vmatprep.subr.mxu0 0.0
        %480 = vmatpush1.msra.mxu0 0.0
        %481 = vmatprep.subr.mxu0 0.0
        %482 = vmatpush1.msra.mxu0 0.0
        %483 = vmatprep.subr.mxu0 0.0
        %484 = vmatpush1.msra.mxu0 0.0
        %485 = vmatprep.subr.mxu0 0.0
        %486 = vmatpush1.msra.mxu0 0.0
        %487 = vmatprep.subr.mxu0 0.0
        %488 = vmatpush1.msra.mxu0 0.0
        %489 = vmatprep.subr.mxu0 0.0
        %490 = vmatpush1.msra.mxu0 0.0
        %491 = vmatprep.subr.mxu0 0.0
        %492 = vmatpush1.msra.mxu0 0.0
        %493 = vmatprep.subr.mxu0 0.0
        %494 = vmatpush1.msra.mxu0 0.0
        %495 = vmatprep.subr.mxu0 0.0
        %496 = vmatpush1.msra.mxu0 0.0
        %497 = vmatprep.subr.mxu0 0.0
        %498 = vmatpush1.msra.mxu0 0.0
        %499 = vmatprep.subr.mxu0 0.0
        %500 = vmatpush1.msra.mxu0 0.0
        %501 = vmatprep.subr.mxu0 0.0
        %502 = vmatpush1.msra.mxu0 0.0
        %503 = vmatprep.subr.mxu0 0.0
        %504 = vmatpush1.msra.mxu0 0.0
        %505 = vmatprep.subr.mxu0 0.0
        %506 = vmatpush1.msra.mxu0 0.0
        %507 = vmatprep.subr.mxu0 0.0
        %508 = vmatpush1.msra.mxu0 0.0
        %509 = vmatprep.subr.mxu0 0.0
        %510 = vmatpush1.msra.mxu0 0.0
        %511 = vmatprep.subr.mxu0 0.0
        %512 = vmatpush1.msra.mxu0 0.0
        %513 = vmatprep.subr.mxu0 0.0
        %514 = vmatpush1.msra.mxu0 0.0
        %515 = vmatprep.subr.mxu0 0.0
        %516 = vmatpush1.msra.mxu0 0.0
        %517 = vmatprep.subr.mxu0 0.0
        %518 = vmatpush1.msra.mxu0 0.0
        %519 = vmatprep.subr.mxu0 0.0
        %520 = vmatpush1.msra.mxu0 0.0
        %521 = vmatprep.subr.mxu0 0.0
        %522 = vmatpush1.msra.mxu0 0.0
        %523 = vmatprep.subr.mxu0 0.0
        %524 = vmatpush1.msra.mxu0 0.0
        %525 = vmatprep.subr.mxu0 0.0
        %526 = vmatpush1.msra.mxu0 0.0
        %527 = vmatprep.subr.mxu0 0.0
        %528 = vmatpush1.msra.mxu0 0.0
        %529 = vmatprep.mubr.f32.mxu0 0.0
        %530 = vmatmul.mubr.f32.gmra.mrb[0].mxu0 %v454
        %v531 = vpop.f32.mrb[0].mxu0
        %v532 = vadd.f32 %v436, %v531
        %v533 = vpop.f32.mrb[0].mxu0
        %v534 = vadd.f32 %v436, %v533
        %535 = vmatprep.mubr.f32.mxu0 0.0
        %536 = vmatmul.mubr.f32.gmra.mrb[0].mxu0 %v457
        %v537 = vpop.f32.mrb[0].mxu0
        %v538 = vadd.f32 %v441, %v537
        %v539 = vpop.f32.mrb[0].mxu0
        %v540 = vadd.f32 %v441, %v539
        %541 = vmatprep.mubr.f32.mxu0 0.0
        %542 = vmatmul.mubr.f32.gmra.mrb[0].mxu0 %v460
        %v543 = vpop.f32.mrb[0].mxu0
        %v544 = vadd.f32 %v446, %v543
        %v545 = vpop.f32.mrb[0].mxu0
        %v546 = vadd.f32 %v446, %v545
        %547 = vmatprep.mubr.f32.mxu0 0.0
        %548 = vmatmul.mubr.f32.gmra.mrb[0].mxu0 %v463
        %v549 = vpop.f32.mrb[0].mxu0
        %v550 = vadd.f32 %v451, %v549
        %v551 = vpop.f32.mrb[0].mxu0
        %v552 = vadd.f32 %v451, %v551
        %553 = vdwg.mxu0
        %vm554 = vcmp.gt.f32.partialorder %v532, 0.0
        %vm555 = vcmp.gt.f32.partialorder %v534, 0.0
        %vm556 = vcmp.gt.f32.partialorder %v538, 0.0
        %vm557 = vcmp.gt.f32.partialorder %v540, 0.0
        %vm558 = vcmp.gt.f32.partialorder %v544, 0.0
        %vm559 = vcmp.gt.f32.partialorder %v546, 0.0
        %vm560 = vcmp.gt.f32.partialorder %v550, 0.0
        %vm561 = vcmp.gt.f32.partialorder %v552, 0.0
        %v562 = vmul.f32 %v532, 0.2
        %v563 = vmul.f32 %v534, 0.2
        %v564 = vmul.f32 %v538, 0.2
        %v565 = vmul.f32 %v540, 0.2
        %v566 = vmul.f32 %v544, 0.2
        %v567 = vmul.f32 %v546, 0.2
        %v568 = vmul.f32 %v550, 0.2
        %v569 = vmul.f32 %v552, 0.2
        %v570 = vsel %vm554, %v532, %v562
        %v571 = vsel %vm555, %v534, %v563
        %v572 = vsel %vm556, %v538, %v564
        %v573 = vsel %vm557, %v540, %v565
        %v574 = vsel %vm558, %v544, %v566
        %v575 = vsel %vm559, %v546, %v567
        %v576 = vsel %vm560, %v550, %v568
        %v577 = vsel %vm561, %v552, %v569
        %v578 = vadd.f32 %v263, %v570
        %v579 = vadd.f32 %v264, %v571
        %v580 = vadd.f32 %v265, %v572
        %v581 = vadd.f32 %v266, %v573
        %v582 = vadd.f32 %v267, %v574
        %v583 = vadd.f32 %v268, %v575
        %v584 = vadd.f32 %v269, %v576
        %v585 = vadd.f32 %v270, %v577
        %586 = vst [vmem:[%s260] sm:$0xff] %v578
        %587 = vst [vmem:[%s260 + $0x8] sm:$0xff] %v579
        %588 = vst [vmem:[%s260 + $0x10] sm:$0xff] %v580
        %589 = vst [vmem:[%s260 + $0x18] sm:$0xff] %v581
        %590 = vst [vmem:[%s260 + $0x20] sm:$0xff] %v582
        %591 = vst [vmem:[%s260 + $0x28] sm:$0xff] %v583
        %592 = vst [vmem:[%s260 + $0x30] sm:$0xff] %v584
        %593 = vst [vmem:[%s260 + $0x38] sm:$0xff] %v585
        %s594 = sand.u32 %s156, 1
        %s595 = scalar_lea.sflag [#allocation4], %s594
        %s596 = sand.u32 %s156, 1
        %s597 = smul.addr %s596, 64
        %s598 = scalar_lea.vmem [#allocation5], %s597
        // Predicated region
        $region45: #{tpu_custom_call.1} parent=39 // pred_check
          %p599 = pneg %p166
        $region46: #{tpu_custom_call.1} parent=39 // pred_check_branch
          %601 = sbr.rel (%p599) target = $region48
        $region47: #{tpu_custom_call.1} parent=39 // pred_region
          %s602 = smul.u32 2, %s27
          %s604 = ssub.s32 1024, 1024
          %605 = vsyncadd %s595, %s604
          %s606 = smul.addr %s26, 8
          %s607 = sadd.s32 %s602, %s606
          %s608 = smul.addr %s607, 128
          %s609 = scalar_lea.hbm %s5, %s608
          %s610 = sshll.u32 %s598, 4
          %s611 = int_to_ptr.vmem [resolvable:$true] %s610
          %616 = dma.vmem_to_hbm [thread:$0]  %s611, 1024, %s609, %s595, 256, 256, 16
        $region48: #{tpu_custom_call.1} parent=39 // pred_fallthru
          _
      $region40: #{tpu_custom_call.1} parent=5 // pred_fallthru
        _
      %p617 = scmp.le.s32.totalorder 2, %s17
      // Predicated region
      $region49: #{tpu_custom_call.1} parent=5 // pred_check
        %p618 = pneg %p617
      $region50: #{tpu_custom_call.1} parent=5 // pred_check_branch
        %620 = sbr.rel (%p618) target = $region52
      $region51: #{tpu_custom_call.1} parent=5 // pred_region
        %s621 = ssub.s32 %s17, 2
        // Predicated region
        $region53: #{tpu_custom_call.1} parent=51 // pred_check
          %p622 = pneg %p172
        $region54: #{tpu_custom_call.1} parent=51 // pred_check_branch
          %624 = sbr.rel (%p622) target = $region56
        $region55: #{tpu_custom_call.1} parent=51 // pred_region
          %s625 = sand.u32 %s157, 1
          %s626 = scalar_lea.sflag [#allocation4], %s625
          %s627 = sand.u32 %s157, 1
          %s628 = smul.addr %s627, 64
          %s629 = scalar_lea.vmem [#allocation5], %s628
          %630 = dma.done %s626, 1024
        $region56: #{tpu_custom_call.1} parent=51 // pred_fallthru
          _
      $region52: #{tpu_custom_call.1} parent=5 // pred_fallthru
        _
    $region6: #{tpu_custom_call.1} parent=1 // loop_footer
      %s21 = sadd.s32 1, %s17
    $region7: #{tpu_custom_call.1} parent=1 // loop_footer_branch
      %16 = sbr.rel target = $region3
    $region8: #{tpu_custom_call.1} parent=1 // loop_exit
      _
    %631 = vsyncpa [#allocation3], 1
    %s632 = scalar_lea.sflag [#allocation3], 1
    %633 = vsyncpa %s632, 1
    %634 = vsyncpa [#allocation4], 1
    %s635 = scalar_lea.sflag [#allocation4], 1
    %636 = vsyncpa %s635, 1

</llo_original>
